<compile_context>
chip_gen: v7x
topology: tpu7x:2x2x1
jax: 0.10.0
libtpu: 0.0.40
codegen_flags: <defaults>
</compile_context>

<pallas_src>
import functools

import jax
import jax.numpy as jnp
from jax.experimental import pallas as pl
from jax.experimental.pallas import tpu as pltpu


def _threshnet_kernel(x_ref, w1_ref, b1_ref, w2_ref, b2_ref, out_ref, *,
                      precision):
    # x_ref : (TILE_B, F)  x tile in native (B, F) layout (pipelined).
    # w1_ref: (H, F)       fc1 weight, PyTorch (out, in) layout (resident).
    # b1_ref: (H, 1)       fc1 bias, broadcast over lanes (resident).
    # w2_ref: (H,)   SMEM  fc2 weight scalars.
    # b2_ref: (1,)   SMEM  fc2 bias scalar.
    # out_ref: (1, TILE_B) lane-dense output tile.
    x = x_ref[...].astype(jnp.float32)      # bf16 input upcasts in VMEM (cheap)
    w1 = w1_ref[...]                        # (H, F)

    # fc1 on the MXU, contracting both last dims: (H,F) x (TILE_B,F) -> (H,TILE_B).
    # Batch lands on the 128-lane axis -> lane-dense bias/ReLU/sigmoid/stores.
    h = jax.lax.dot_general(
        w1, x,
        dimension_numbers=(((1,), (1,)), ((), ())),
        preferred_element_type=jnp.float32,
        precision=precision)
    h = jnp.maximum(h + b1_ref[...], 0.0)   # bias + ReLU on full-lane slabs

    # fc2 (H=3 -> 1) on the VPU: unrolled weighted sum, fc2 params as SMEM scalars.
    hidden = w1_ref.shape[0]
    y = h[0:1, :] * w2_ref[0]
    for k in range(1, hidden):
        y = y + h[k:k + 1, :] * w2_ref[k]
    y = y + b2_ref[0]

    out_ref[...] = jax.nn.sigmoid(y).astype(out_ref.dtype)   # exp -> EUP slot


def _round_up(a, m):
    return ((a + m - 1) // m) * m


def _vmem_capacity_bytes():
    try:
        return int(pltpu.get_tpu_info().vmem_capacity_bytes)
    except Exception:
        return 64 << 20   # smallest of the supported parts (v7x per-TC)


def _derive_tile_b(batch, feature_dim, itemsize):
    """Batch tile: ~4 MiB of x per step, VMEM-safe, >=2 grid steps when possible."""
    mxu = 256                               # MXU width on v6e/v7x; multiple of 128
    target_step_bytes = 4 << 20             # amortizes ~0.35us/step overhead
    vmem_bytes = _vmem_capacity_bytes()
    per_col = max(1, itemsize * feature_dim)        # bytes of x per batch element
    tile_b = target_step_bytes // per_col
    tile_b = min(tile_b, (vmem_bytes // 4) // (2 * per_col))   # 2x-buffered x <= 25% VMEM
    tile_b = min(tile_b, _round_up(batch, mxu))                # never bigger than needed
    if batch > mxu:                                            # >=2 steps -> both v7x TCs
        tile_b = min(tile_b, _round_up((batch + 1) // 2, mxu))
    tile_b = max(mxu, (tile_b // mxu) * mxu)
    return int(tile_b)


def threshnet_forward(x, w1, b1, w2, b2, *, tile_b=None,
                      precision=jax.lax.Precision.HIGHEST):
    """ThreshNet forward pass.

    x  : (B, F) float32 or bfloat16
    w1 : (H, F) float32   -- fc1.weight, PyTorch (out, in) layout
    b1 : (H,)   float32   -- fc1.bias
    w2 : (1, H) float32   -- fc2.weight
    b2 : (1,)   float32   -- fc2.bias
    returns (B, 1) float32, matching the nn.Module output shape.
    """
    B, F = x.shape
    H = w1.shape[0]
    w2 = w2.reshape(H)
    b2 = b2.reshape(1)
    b1 = b1.reshape(H, 1)

    itemsize = jnp.dtype(x.dtype).itemsize
    if tile_b is None:
        tile_b = _derive_tile_b(B, F, itemsize)
    assert tile_b % 128 == 0, "tile_b must be a multiple of 128 (lane width)"

    grid = (pl.cdiv(B, tile_b),)

    # Explicit scoped-VMEM limit: >= the computed need (double-buffered x tile +
    # out tile + residents + slack) but at least 32 MiB, never above physical.
    x_tile_bytes = tile_b * F * itemsize
    out_tile_bytes = tile_b * 4
    resident_bytes = (H * F + H) * 4
    need = 2 * (x_tile_bytes + out_tile_bytes + resident_bytes)
    vmem_limit = int(min(_vmem_capacity_bytes(), max(need + (8 << 20), 32 << 20)))

    cost = pl.CostEstimate(
        flops=2 * B * F * H + 2 * B * H,
        transcendentals=B,
        bytes_accessed=itemsize * B * F + 4 * B + 4 * (H * F + 2 * H + 1))

    kernel = functools.partial(_threshnet_kernel, precision=precision)

    out = pl.pallas_call(
        kernel,
        out_shape=jax.ShapeDtypeStruct((1, B), jnp.float32),
        grid=grid,
        in_specs=[
            pl.BlockSpec((tile_b, F), lambda i: (i, 0)),            # x: pipelined
            pl.BlockSpec((H, F), lambda i: (0, 0)),                 # w1: resident
            pl.BlockSpec((H, 1), lambda i: (0, 0)),                 # b1: resident
            pl.BlockSpec(memory_space=pltpu.MemorySpace.SMEM),      # w2 scalars
            pl.BlockSpec(memory_space=pltpu.MemorySpace.SMEM),      # b2 scalar
        ],
        out_specs=pl.BlockSpec((1, tile_b), lambda i: (0, i)),      # lane-dense
        compiler_params=pltpu.CompilerParams(
            dimension_semantics=("parallel",),
            vmem_limit_bytes=vmem_limit),
        cost_estimate=cost,
    )(x, w1, b1, w2, b2)

    # Keep this slice/reshape: OOB lanes of a ragged last block never appear
    # in `out` (stores are masked), and the module returns shape (B, 1).
    return out[0, :].reshape(B, 1)


def init_params(key, feature_dim, hidden_dim=3):
    """Deterministic init mimicking nn.Linear default (uniform +-1/sqrt(fan_in)).

    Weights are kept in PyTorch (out_features, in_features) layout.
    """
    k1, k2, k3, k4 = jax.random.split(key, 4)
    lim1 = 1.0 / jnp.sqrt(feature_dim)
    lim2 = 1.0 / jnp.sqrt(hidden_dim)
    w1 = jax.random.uniform(k1, (hidden_dim, feature_dim), jnp.float32, -lim1, lim1)
    b1 = jax.random.uniform(k2, (hidden_dim,), jnp.float32, -lim1, lim1)
    w2 = jax.random.uniform(k3, (1, hidden_dim), jnp.float32, -lim2, lim2)
    b2 = jax.random.uniform(k4, (1,), jnp.float32, -lim2, lim2)
    return w1, b1, w2, b2


if __name__ == "__main__":
    key = jax.random.PRNGKey(0)
    kx, kp = jax.random.split(key)

    # Small shapes; batch=300 with tile_b=256 exercises a 2-step grid and the
    # ragged last block (masked output stores).
    batch, feature_dim, hidden_dim = 300, 32, 3
    x = jax.random.normal(kx, (batch, feature_dim), dtype=jnp.float32)
    w1, b1, w2, b2 = init_params(kp, feature_dim, hidden_dim)

    out = threshnet_forward(x, w1, b1, w2, b2, tile_b=256)
    out = jax.block_until_ready(out)

    # Pure-JAX reference at matching matmul precision.
    hp = jax.lax.Precision.HIGHEST
    h_ref = jnp.maximum(jnp.dot(x, w1.T, precision=hp) + b1, 0.0)
    ref = jax.nn.sigmoid(jnp.dot(h_ref, w2.T, precision=hp) + b2)

    assert out.shape == (batch, 1)
    assert jnp.allclose(out, ref, atol=1e-5), "mismatch vs reference (explicit tile)"

    # Also exercise the auto tile-sizing path (F- and VMEM-derived tile_b).
    out2 = jax.block_until_ready(threshnet_forward(x, w1, b1, w2, b2))
    assert jnp.allclose(out2, ref, atol=1e-5), "mismatch vs reference (auto tile)"

    print("KERNEL_OK")
</pallas_src>

<mosaic_0001>
module attributes {stable_mosaic.version = 11 : i64} {
  func.func @_threshnet_kernel(%arg0: i32, %arg1: memref<256x32xf32, #tpu.memory_space<vmem>>, %arg2: memref<3x32xf32, #tpu.memory_space<vmem>>, %arg3: memref<3x1xf32, #tpu.memory_space<vmem>>, %arg4: memref<3xf32, #tpu.memory_space<smem>>, %arg5: memref<1xf32, #tpu.memory_space<smem>>, %arg6: memref<1x256xf32, #tpu.memory_space<vmem>>) attributes {dimension_semantics = [#tpu.dimension_semantics<parallel>], iteration_bounds = array<i64: 2>, scalar_prefetch = 0 : i64, scratch_operands = 0 : i64, tpu.core_type = #tpu.core_type<tc>, window_params = [{transform_indices = @transform_0, window_bounds = array<i64: 256, 32>}, {pipeline_mode = #tpu.pipeline_mode<synchronous>, transform_indices = @transform_1, window_bounds = array<i64: 3, 32>}, {pipeline_mode = #tpu.pipeline_mode<synchronous>, transform_indices = @transform_2, window_bounds = array<i64: 3, 1>}, {transform_indices = @transform_3, window_bounds = array<i64: 3>}, {transform_indices = @transform_4, window_bounds = array<i64: 1>}, {transform_indices = @transform_5, window_bounds = array<i64: 1, 256>}]} {
    %c0 = arith.constant 0 : index
    %c0_0 = arith.constant 0 : index
    %0 = vector.load %arg1[%c0, %c0_0] : memref<256x32xf32, #tpu.memory_space<vmem>>, vector<256x32xf32>
    %c0_1 = arith.constant 0 : index
    %c0_2 = arith.constant 0 : index
    %1 = vector.load %arg2[%c0_1, %c0_2] : memref<3x32xf32, #tpu.memory_space<vmem>>, vector<3x32xf32>
    %cst = arith.constant dense<0.000000e+00> : vector<3x256xf32>
    %2 = tpu.matmul %1, %0, %cst {dimension_numbers = #tpu.dot_dimension_numbers<[1], [1], [0], [0], [0, 0, 1, 0], [], []>, precision = #tpu.contract_precision<fp32>} : vector<3x32xf32>, vector<256x32xf32>, vector<3x256xf32> -> vector<3x256xf32>
    %c0_3 = arith.constant 0 : index
    %c0_4 = arith.constant 0 : index
    %3 = vector.load %arg3[%c0_3, %c0_4] : memref<3x1xf32, #tpu.memory_space<vmem>>, vector<3x1xf32>
    %4 = vector.broadcast %3 : vector<3x1xf32> to vector<3x256xf32>
    %5 = arith.addf %2, %4 : vector<3x256xf32>
    %cst_5 = arith.constant 0.000000e+00 : f32
    %6 = vector.broadcast %cst_5 : f32 to vector<3x256xf32>
    %7 = arith.maximumf %5, %6 : vector<3x256xf32>
    %8 = vector.extract_strided_slice %7 {offsets = [0, 0], sizes = [1, 256], strides = [1, 1]} : vector<3x256xf32> to vector<1x256xf32>
    %c0_6 = arith.constant 0 : index
    %9 = memref.load %arg4[%c0_6] : memref<3xf32, #tpu.memory_space<smem>>
    %10 = vector.broadcast %9 : f32 to vector<1x256xf32>
    %11 = arith.mulf %8, %10 : vector<1x256xf32>
    %12 = vector.extract_strided_slice %7 {offsets = [1, 0], sizes = [1, 256], strides = [1, 1]} : vector<3x256xf32> to vector<1x256xf32>
    %c1 = arith.constant 1 : index
    %13 = memref.load %arg4[%c1] : memref<3xf32, #tpu.memory_space<smem>>
    %14 = vector.broadcast %13 : f32 to vector<1x256xf32>
    %15 = arith.mulf %12, %14 : vector<1x256xf32>
    %16 = arith.addf %11, %15 : vector<1x256xf32>
    %17 = vector.extract_strided_slice %7 {offsets = [2, 0], sizes = [1, 256], strides = [1, 1]} : vector<3x256xf32> to vector<1x256xf32>
    %c2 = arith.constant 2 : index
    %18 = memref.load %arg4[%c2] : memref<3xf32, #tpu.memory_space<smem>>
    %19 = vector.broadcast %18 : f32 to vector<1x256xf32>
    %20 = arith.mulf %17, %19 : vector<1x256xf32>
    %21 = arith.addf %16, %20 : vector<1x256xf32>
    %c0_7 = arith.constant 0 : index
    %22 = memref.load %arg5[%c0_7] : memref<1xf32, #tpu.memory_space<smem>>
    %23 = vector.broadcast %22 : f32 to vector<1x256xf32>
    %24 = arith.addf %21, %23 : vector<1x256xf32>
    %25 = arith.negf %24 : vector<1x256xf32>
    %26 = math.exp %25 : vector<1x256xf32>
    %cst_8 = arith.constant 1.000000e+00 : f32
    %27 = vector.broadcast %cst_8 : f32 to vector<1x256xf32>
    %28 = arith.addf %27, %26 : vector<1x256xf32>
    %29 = arith.divf %27, %28 : vector<1x256xf32>
    %c0_9 = arith.constant 0 : index
    %c0_10 = arith.constant 0 : index
    %30 = vector.load %arg6[%c0_9, %c0_10] : memref<1x256xf32, #tpu.memory_space<vmem>>, vector<1x256xf32>
    tpu.vector_store %arg6[%c0_9, %c0_10], %29 {strides = array<i32>} : memref<1x256xf32, #tpu.memory_space<vmem>>, vector<1x256xf32>,
    return
  }
  func.func @transform_0(%arg0: i32) -> (i32, i32) {
    %c0_i32 = arith.constant 0 : i32
    %c0_i32_0 = arith.constant 0 : i32
    return %arg0, %c0_i32 : i32, i32
  }
  func.func @transform_1(%arg0: i32) -> (i32, i32) {
    %c0_i32 = arith.constant 0 : i32
    %c0_i32_0 = arith.constant 0 : i32
    %c0_i32_1 = arith.constant 0 : i32
    return %c0_i32, %c0_i32_0 : i32, i32
  }
  func.func @transform_2(%arg0: i32) -> (i32, i32) {
    %c0_i32 = arith.constant 0 : i32
    %c0_i32_0 = arith.constant 0 : i32
    %c0_i32_1 = arith.constant 0 : i32
    return %c0_i32, %c0_i32_0 : i32, i32
  }
  func.func @transform_3(%arg0: i32) -> i32 {
    %c0_i32 = arith.constant 0 : i32
    %c0_i32_0 = arith.constant 0 : i32
    return %c0_i32 : i32
  }
  func.func @transform_4(%arg0: i32) -> i32 {
    %c0_i32 = arith.constant 0 : i32
    %c0_i32_0 = arith.constant 0 : i32
    return %c0_i32 : i32
  }
  func.func @transform_5(%arg0: i32) -> (i32, i32) {
    %c0_i32 = arith.constant 0 : i32
    %c0_i32_0 = arith.constant 0 : i32
    return %c0_i32, %arg0 : i32, i32
  }
}

</mosaic_0001>

<llo_original>
// kernel: tpu_custom_call.1
$region0: #{tpu_custom_call.1}
  #allocation0 [shape = 'u32[]', space=smem, size = 0x4, offset = 0x4, fixed_abs, tag = 'smem constant byte address 0x4 - core index']
  #allocation1 [shape = 'u32[144,128]{1,0:T(1,128)}', space=vmem, size = 0x12000, scoped, tag = 'internal scratch']
  #allocation2 [shape = 'f32[1]{0:T(128)S(6)}', space=smem, size = 0x200, scoped, tag = 'scoped memory for tpu_custom_call.1']
  %s0 = inlined_call_operand.vmem [shape: f32[300,32], index: 0, kind: input, shape index: {}]
  %s1 = inlined_call_operand.vmem [shape: f32[3,32], index: 1, kind: input, shape index: {}]
  %s2 = inlined_call_operand.vmem [shape: f32[3,1], index: 2, kind: input, shape index: {}]
  %s3 = inlined_call_operand.vmem [shape: f32[3], index: 3, kind: input, shape index: {}]
  %s4 = inlined_call_operand.<no memory space> [shape: f32[1], index: 4, kind: input, shape index: {}]
  %s5 = inlined_call_operand.hbm [shape: f32[1,300], index: 5, kind: output, shape index: {}]
  %s6 = sld [smem:[#allocation0]]
  $region57: #{tpu_custom_call.1} parent=0
    _
  %s8 = ssub.s32 1, %s6
  %s9 = scalar_select 0, %s8, %s6
  %10 = sst [smem:[#allocation2]] %s4
  $region1: #{tpu_custom_call.1} parent=0
    #allocation3 [shape = 'u8[512]{0}', space=smem, size = 0x200, scoped, tag = 'input window, operand 3, single buffered']
    #allocation4 [shape = 's32[2]{0}', space=sflag, size = 0x8, scoped, tag = 'scoped memory for tpu_custom_call.1']
    #allocation5 [shape = 's32[2]{0}', space=sflag, size = 0x8, scoped, tag = 'scoped memory for tpu_custom_call.1']
    #allocation6 [shape = 'u8[2048]{0}', space=vmem, size = 0x800, scoped, tag = 'output window, operand 0']
    %11 = vsyncpa [#allocation5], 0
    %12 = vsyncpa [#allocation4], 0
    %s13 = scalar_lea.sflag [#allocation4], 1
    %14 = vsyncpa %s13, 0
    loop: start=0, step=1, limit=4
    $region2: #{tpu_custom_call.1} parent=1 // loop_pre_header
      _
    $region3: #{tpu_custom_call.1} parent=1 // loop_header
      %s16 = sphi 0, %s20
      %p17 = scmp.ge.s32.totalorder %s16, 4
      %s26 = sphi 0, %s28
      %s29 = sphi 0, %s26
      %s30 = sphi 0, %s29
      %s46 = sphi 0, %s30
      %s50 = sphi 0, %s50
      %s52 = sphi 0, %s50
      %s53 = sphi 0, %s52
      %s67 = sphi 0, %s53
      %s71 = sphi 0, %s71
      %s73 = sphi 0, %s71
      %s74 = sphi 0, %s73
      %s88 = sphi 0, %s74
      %s92 = sphi 0, %s92
      %s94 = sphi 0, %s92
      %s95 = sphi 0, %s94
      %s109 = sphi 0, %s95
      %s113 = sphi 0, %s113
      %s115 = sphi 0, %s113
      %s116 = sphi 0, %s115
      %s130 = sphi 0, %s116
      %s136 = sphi 0, %s138
      %s139 = sphi 0, %s136
      %s140 = sphi 0, %s139
      %s156 = sphi 0, %s140
    $region4: #{tpu_custom_call.1} parent=1 // loop_header_branch
      %19 = sbr.rel (%p17) target = $region8
    $region5: #{tpu_custom_call.1} parent=1 // loop_body
      %s21 = ssub.s32 %s16, 1
      %s22 = ssub.s32 %s16, 2
      %s23 = sadd.s32 %s16, 1
      %s24 = ssub.s32 %s16, %s23
      %p25 = scmp.eq.s32.totalorder %s24, 0
      %s27 = sadd.s32 %s26, 1
      %s28 = scalar_select %p25, %s26, %s27
      %p31 = pneg %p25
      %p32 = scmp.eq.s32.totalorder %s16, 1
      %p33 = por %p31, %p32
      %p34 = scmp.ne.s32.totalorder %s26, %s29
      %p35 = scmp.eq.s32.totalorder %s16, 0
      %p36 = por %p34, %p35
      %p37 = scmp.ne.s32.totalorder %s26, %s29
      %p38 = scmp.eq.s32.totalorder %s21, 1
      %p39 = por %p37, %p38
      %p40 = scmp.ne.s32.totalorder %s29, %s30
      %p41 = scmp.eq.s32.totalorder %s21, 0
      %p42 = por %p40, %p41
      %p43 = scmp.ne.s32.totalorder %s29, %s30
      %p44 = scmp.eq.s32.totalorder %s22, 1
      %p45 = por %p43, %p44
      %p47 = scmp.ne.s32.totalorder %s30, %s46
      %p48 = scmp.eq.s32.totalorder %s22, 0
      %p49 = por %p47, %p48
      %s51 = sadd.s32 %s50, 1
      %p54 = scmp.eq.s32.totalorder %s16, 1
      %p55 = scmp.ne.s32.totalorder %s50, %s52
      %p56 = scmp.eq.s32.totalorder %s16, 0
      %p57 = por %p55, %p56
      %p58 = scmp.ne.s32.totalorder %s50, %s52
      %p59 = scmp.eq.s32.totalorder %s21, 1
      %p60 = por %p58, %p59
      %p61 = scmp.ne.s32.totalorder %s52, %s53
      %p62 = scmp.eq.s32.totalorder %s21, 0
      %p63 = por %p61, %p62
      %p64 = scmp.ne.s32.totalorder %s52, %s53
      %p65 = scmp.eq.s32.totalorder %s22, 1
      %p66 = por %p64, %p65
      %p68 = scmp.ne.s32.totalorder %s53, %s67
      %p69 = scmp.eq.s32.totalorder %s22, 0
      %p70 = por %p68, %p69
      %s72 = sadd.s32 %s71, 1
      %p75 = scmp.eq.s32.totalorder %s16, 1
      %p76 = scmp.ne.s32.totalorder %s71, %s73
      %p77 = scmp.eq.s32.totalorder %s16, 0
      %p78 = por %p76, %p77
      %p79 = scmp.ne.s32.totalorder %s71, %s73
      %p80 = scmp.eq.s32.totalorder %s21, 1
      %p81 = por %p79, %p80
      %p82 = scmp.ne.s32.totalorder %s73, %s74
      %p83 = scmp.eq.s32.totalorder %s21, 0
      %p84 = por %p82, %p83
      %p85 = scmp.ne.s32.totalorder %s73, %s74
      %p86 = scmp.eq.s32.totalorder %s22, 1
      %p87 = por %p85, %p86
      %p89 = scmp.ne.s32.totalorder %s74, %s88
      %p90 = scmp.eq.s32.totalorder %s22, 0
      %p91 = por %p89, %p90
      %s93 = sadd.s32 %s92, 1
      %p96 = scmp.eq.s32.totalorder %s16, 1
      %p97 = scmp.ne.s32.totalorder %s92, %s94
      %p98 = scmp.eq.s32.totalorder %s16, 0
      %p99 = por %p97, %p98
      %p100 = scmp.ne.s32.totalorder %s92, %s94
      %p101 = scmp.eq.s32.totalorder %s21, 1
      %p102 = por %p100, %p101
      %p103 = scmp.ne.s32.totalorder %s94, %s95
      %p104 = scmp.eq.s32.totalorder %s21, 0
      %p105 = por %p103, %p104
      %p106 = scmp.ne.s32.totalorder %s94, %s95
      %p107 = scmp.eq.s32.totalorder %s22, 1
      %p108 = por %p106, %p107
      %p110 = scmp.ne.s32.totalorder %s95, %s109
      %p111 = scmp.eq.s32.totalorder %s22, 0
      %p112 = por %p110, %p111
      %s114 = sadd.s32 %s113, 1
      %p117 = scmp.eq.s32.totalorder %s16, 1
      %p118 = scmp.ne.s32.totalorder %s113, %s115
      %p119 = scmp.eq.s32.totalorder %s16, 0
      %p120 = por %p118, %p119
      %p121 = scmp.ne.s32.totalorder %s113, %s115
      %p122 = scmp.eq.s32.totalorder %s21, 1
      %p123 = por %p121, %p122
      %p124 = scmp.ne.s32.totalorder %s115, %s116
      %p125 = scmp.eq.s32.totalorder %s21, 0
      %p126 = por %p124, %p125
      %p127 = scmp.ne.s32.totalorder %s115, %s116
      %p128 = scmp.eq.s32.totalorder %s22, 1
      %p129 = por %p127, %p128
      %p131 = scmp.ne.s32.totalorder %s116, %s130
      %p132 = scmp.eq.s32.totalorder %s22, 0
      %p133 = por %p131, %p132
      %s134 = ssub.s32 %s16, %s23
      %p135 = scmp.eq.s32.totalorder %s134, 0
      %s137 = sadd.s32 %s136, 1
      %s138 = scalar_select %p135, %s136, %s137
      %p141 = pneg %p135
      %p142 = scmp.eq.s32.totalorder %s16, 1
      %p143 = por %p141, %p142
      %p144 = scmp.ne.s32.totalorder %s136, %s139
      %p145 = scmp.eq.s32.totalorder %s16, 0
      %p146 = por %p144, %p145
      %p147 = scmp.ne.s32.totalorder %s136, %s139
      %p148 = scmp.eq.s32.totalorder %s21, 1
      %p149 = por %p147, %p148
      %p150 = scmp.ne.s32.totalorder %s139, %s140
      %p151 = scmp.eq.s32.totalorder %s21, 0
      %p152 = por %p150, %p151
      %p153 = scmp.ne.s32.totalorder %s139, %s140
      %p154 = scmp.eq.s32.totalorder %s22, 1
      %p155 = por %p153, %p154
      %p157 = scmp.ne.s32.totalorder %s140, %s156
      %p158 = scmp.eq.s32.totalorder %s22, 0
      %p159 = por %p157, %p158
      %p160 = scmp.le.s32.totalorder 1, %s16
      %p161 = scmp.lt.s32.totalorder %s16, 3
      %p162 = pnand %p160, %p161
      %p163 = pneg %p162
      // Predicated region
      $region9: #{tpu_custom_call.1} parent=5 // pred_check
        _
      $region10: #{tpu_custom_call.1} parent=5 // pred_check_branch
        %165 = sbr.rel (%p162) target = $region12
      $region11: #{tpu_custom_call.1} parent=5 // pred_region
        %s166 = ssub.s32 %s16, 1
        // Predicated region
        $region13: #{tpu_custom_call.1} parent=11 // pred_check
          %p167 = pneg %p63
        $region14: #{tpu_custom_call.1} parent=11 // pred_check_branch
          %169 = sbr.rel (%p167) target = $region16
        $region15: #{tpu_custom_call.1} parent=11 // pred_region
          _
        $region16: #{tpu_custom_call.1} parent=11 // pred_fallthru
          _
        // Predicated region
        $region17: #{tpu_custom_call.1} parent=11 // pred_check
          %p170 = pneg %p84
        $region18: #{tpu_custom_call.1} parent=11 // pred_check_branch
          %172 = sbr.rel (%p170) target = $region20
        $region19: #{tpu_custom_call.1} parent=11 // pred_region
          _
        $region20: #{tpu_custom_call.1} parent=11 // pred_fallthru
          _
        // Predicated region
        $region21: #{tpu_custom_call.1} parent=11 // pred_check
          %p173 = pneg %p105
        $region22: #{tpu_custom_call.1} parent=11 // pred_check_branch
          %175 = sbr.rel (%p173) target = $region24
        $region23: #{tpu_custom_call.1} parent=11 // pred_region
          %s177 = ssub.s32 16, 16
          %178 = vsyncadd [#allocation5], %s177
          %s180 = sshll.u32 %s3, 4
          %s181 = int_to_ptr.vmem [resolvable:$true] %s180
          %183 = dma.vmem_to_smem %s181, 16, [#allocation3], [#allocation5]
        $region24: #{tpu_custom_call.1} parent=11 // pred_fallthru
          _
        // Predicated region
        $region25: #{tpu_custom_call.1} parent=11 // pred_check
          %p184 = pneg %p126
        $region26: #{tpu_custom_call.1} parent=11 // pred_check_branch
          %186 = sbr.rel (%p184) target = $region28
        $region27: #{tpu_custom_call.1} parent=11 // pred_region
          _
        $region28: #{tpu_custom_call.1} parent=11 // pred_fallthru
          _
      $region12: #{tpu_custom_call.1} parent=5 // pred_fallthru
        _
      %p187 = scmp.lt.s32.totalorder %s16, 2
      // Predicated region
      $region29: #{tpu_custom_call.1} parent=5 // pred_check
        %p188 = pneg %p187
      $region30: #{tpu_custom_call.1} parent=5 // pred_check_branch
        %190 = sbr.rel (%p188) target = $region32
      $region31: #{tpu_custom_call.1} parent=5 // pred_region
        // Predicated region
        $region33: #{tpu_custom_call.1} parent=31 // pred_check
          %p191 = pneg %p36
        $region34: #{tpu_custom_call.1} parent=31 // pred_check_branch
          %193 = sbr.rel (%p191) target = $region36
        $region35: #{tpu_custom_call.1} parent=31 // pred_region
          %s194 = smul.u32 32, %s16
          %s195 = ssub.s32 38, %s194
          %p196 = scmp.lt.s32.totalorder %s195, 32
          %s197 = scalar_select %p196, %s195, 32
          %s198 = smul.u32 128, %s197
          %p199 = scmp.lt.s32.totalorder %s194, 37
          %s200 = scalar_select %p199, %s194, 37
          %s201 = smul.addr %s200, 8
          %s202 = scalar_lea.vmem %s0, %s201
          %s203 = smul.u32 32, %s16
          %s204 = ssub.s32 38, %s203
          %p205 = scmp.lt.s32.totalorder %s204, 32
          %s206 = scalar_select %p205, %s204, 32
          %s207 = smul.u32 128, %s206
        $region36: #{tpu_custom_call.1} parent=31 // pred_fallthru
          _
      $region32: #{tpu_custom_call.1} parent=5 // pred_fallthru
        _
      %p208 = scmp.le.s32.totalorder 1, %s16
      %p209 = scmp.lt.s32.totalorder %s16, 3
      %p210 = pnand %p208, %p209
      %p211 = pneg %p210
      // Predicated region
      $region37: #{tpu_custom_call.1} parent=5 // pred_check
        _
      $region38: #{tpu_custom_call.1} parent=5 // pred_check_branch
        %213 = sbr.rel (%p210) target = $region40
      $region39: #{tpu_custom_call.1} parent=5 // pred_region
        %s214 = ssub.s32 %s16, 1
        // Predicated region
        $region41: #{tpu_custom_call.1} parent=39 // pred_check
          %p215 = pneg %p105
        $region42: #{tpu_custom_call.1} parent=39 // pred_check_branch
          %217 = sbr.rel (%p215) target = $region44
        $region43: #{tpu_custom_call.1} parent=39 // pred_region
          %218 = dma.done [#allocation5], 16
        $region44: #{tpu_custom_call.1} parent=39 // pred_fallthru
          _
        %219 = sfence
        %s220 = smul.u32 32, %s21
        %s221 = ssub.s32 38, %s220
        %p222 = scmp.lt.s32.totalorder %s221, 32
        %s223 = scalar_select %p222, %s221, 32
        %s224 = smul.u32 128, %s223
        %p225 = scmp.lt.s32.totalorder %s220, 37
        %s226 = scalar_select %p225, %s220, 37
        %s227 = smul.addr %s226, 8
        %s228 = scalar_lea.vmem %s0, %s227
        %p229 = pneg %p42
        %p230 = pneg %p39
        %p231 = pneg %p63
        %p232 = pneg %p60
        %p233 = pneg %p84
        %p234 = pneg %p81
        %p235 = pneg %p105
        %p236 = pneg %p102
        %p237 = pneg %p126
        %p238 = pneg %p123
        %p239 = pneg %p152
        %p240 = pneg %p149
        %s241 = sand.u32 %s139, 1
        %s242 = scalar_lea.sflag [#allocation4], %s241
        %s243 = sand.u32 %s139, 1
        %s244 = smul.addr %s243, 2
        %s245 = scalar_lea.vmem [#allocation6], %s244
        %s246 = smul.u32 32, %s21
        %s247 = ssub.s32 38, %s246
        %p248 = scmp.lt.s32.totalorder %s247, 32
        %s249 = scalar_select %p248, %s247, 32
        %s250 = smul.u32 128, %s249
        %p251 = scmp.lt.s32.totalorder %s246, 37
        %s252 = scalar_select %p251, %s246, 37
        %s253 = smul.addr %s252, 8
        %s254 = scalar_lea.vmem %s0, %s253
        %s255 = smul.u32 32, %s21
        %s256 = ssub.s32 38, %s255
        %p257 = scmp.lt.s32.totalorder %s256, 32
        %s258 = scalar_select %p257, %s256, 32
        %s259 = smul.u32 128, %s258
        %s260 = smul.u32 2, %s21
        %s261 = ssub.s32 3, %s260
        %p262 = scmp.lt.s32.totalorder %s261, 2
        %s263 = scalar_select %p262, %s261, 2
        %s264 = smul.u32 16, %s263
        %v265 = vld [vmem:[%s254] sm:$0xff]
        %v266 = vld [vmem:[%s254 + $0x8] sm:$0xff]
        %v267 = vld [vmem:[%s254 + $0x10] sm:$0xff]
        %v268 = vld [vmem:[%s254 + $0x18] sm:$0xff]
        %v269 = vld [vmem:[%s254 + $0x20] sm:$0xff]
        %v270 = vld [vmem:[%s254 + $0x28] sm:$0xff]
        %v271 = vld [vmem:[%s254 + $0x30] sm:$0xff]
        %v272 = vld [vmem:[%s254 + $0x38] sm:$0xff]
        %v273 = vld [vmem:[%s254 + $0x40] sm:$0xff]
        %v274 = vld [vmem:[%s254 + $0x48] sm:$0xff]
        %v275 = vld [vmem:[%s254 + $0x50] sm:$0xff]
        %v276 = vld [vmem:[%s254 + $0x58] sm:$0xff]
        %v277 = vld [vmem:[%s254 + $0x60] sm:$0xff]
        %v278 = vld [vmem:[%s254 + $0x68] sm:$0xff]
        %v279 = vld [vmem:[%s254 + $0x70] sm:$0xff]
        %v280 = vld [vmem:[%s254 + $0x78] sm:$0xff]
        %v281 = vld [vmem:[%s254 + $0x80] sm:$0xff]
        %v282 = vld [vmem:[%s254 + $0x88] sm:$0xff]
        %v283 = vld [vmem:[%s254 + $0x90] sm:$0xff]
        %v284 = vld [vmem:[%s254 + $0x98] sm:$0xff]
        %v285 = vld [vmem:[%s254 + $0xa0] sm:$0xff]
        %v286 = vld [vmem:[%s254 + $0xa8] sm:$0xff]
        %v287 = vld [vmem:[%s254 + $0xb0] sm:$0xff]
        %v288 = vld [vmem:[%s254 + $0xb8] sm:$0xff]
        %v289 = vld [vmem:[%s254 + $0xc0] sm:$0xff]
        %v290 = vld [vmem:[%s254 + $0xc8] sm:$0xff]
        %v291 = vld [vmem:[%s254 + $0xd0] sm:$0xff]
        %v292 = vld [vmem:[%s254 + $0xd8] sm:$0xff]
        %v293 = vld [vmem:[%s254 + $0xe0] sm:$0xff]
        %v294 = vld [vmem:[%s254 + $0xe8] sm:$0xff]
        %v295 = vld [vmem:[%s254 + $0xf0] sm:$0xff]
        %v296 = vld [vmem:[%s254 + $0xf8] sm:$0xff]
        %v297 = vld [vmem:[%s1] sm:$0x7]
        %v298 = vld [vmem:[%s2] sm:$0x7]
        %300 = vset.pattern.permute.xlu0 0
        %301 = vperm.xlu0 %300, %v298
        %v302 = vpop.permute.xlu0 %301
        %vm304 = vcmask 261120
        %v306 = vsel %vm304, %v297, 0
        %v309 = vsel %vm304, %v265, 0
        %v312 = vsel %vm304, %v266, 0
        %v315 = vsel %vm304, %v267, 0
        %v318 = vsel %vm304, %v268, 0
        %v321 = vsel %vm304, %v269, 0
        %v324 = vsel %vm304, %v270, 0
        %v327 = vsel %vm304, %v271, 0
        %v330 = vsel %vm304, %v272, 0
        %v333 = vsel %vm304, %v273, 0
        %v336 = vsel %vm304, %v274, 0
        %v339 = vsel %vm304, %v275, 0
        %v342 = vsel %vm304, %v276, 0
        %v345 = vsel %vm304, %v277, 0
        %v348 = vsel %vm304, %v278, 0
        %v351 = vsel %vm304, %v279, 0
        %v354 = vsel %vm304, %v280, 0
        %v357 = vsel %vm304, %v281, 0
        %v360 = vsel %vm304, %v282, 0
        %v363 = vsel %vm304, %v283, 0
        %v366 = vsel %vm304, %v284, 0
        %v369 = vsel %vm304, %v285, 0
        %v372 = vsel %vm304, %v286, 0
        %v375 = vsel %vm304, %v287, 0
        %v378 = vsel %vm304, %v288, 0
        %v381 = vsel %vm304, %v289, 0
        %v384 = vsel %vm304, %v290, 0
        %v387 = vsel %vm304, %v291, 0
        %v390 = vsel %vm304, %v292, 0
        %v393 = vsel %vm304, %v293, 0
        %v396 = vsel %vm304, %v294, 0
        %v399 = vsel %vm304, %v295, 0
        %v402 = vsel %vm304, %v296, 0
        %404 = vmatprep.subr.mxu0 0.0
        %v405 = vand.u32 %v309, 4294901760
        %406 = vmatpush1.xpose.msra.mxu0 %v405
        %407 = vmatprep.subr.mxu0 0.0
        %v408 = vand.u32 %v312, 4294901760
        %409 = vmatpush1.xpose.msra.mxu0 %v408
        %410 = vmatprep.subr.mxu0 0.0
        %v411 = vand.u32 %v315, 4294901760
        %412 = vmatpush1.xpose.msra.mxu0 %v411
        %413 = vmatprep.subr.mxu0 0.0
        %v414 = vand.u32 %v318, 4294901760
        %415 = vmatpush1.xpose.msra.mxu0 %v414
        %416 = vmatprep.subr.mxu0 0.0
        %v417 = vand.u32 %v321, 4294901760
        %418 = vmatpush1.xpose.msra.mxu0 %v417
        %419 = vmatprep.subr.mxu0 0.0
        %v420 = vand.u32 %v324, 4294901760
        %421 = vmatpush1.xpose.msra.mxu0 %v420
        %422 = vmatprep.subr.mxu0 0.0
        %v423 = vand.u32 %v327, 4294901760
        %424 = vmatpush1.xpose.msra.mxu0 %v423
        %425 = vmatprep.subr.mxu0 0.0
        %v426 = vand.u32 %v330, 4294901760
        %427 = vmatpush1.xpose.msra.mxu0 %v426
        %428 = vmatprep.subr.mxu0 0.0
        %v429 = vand.u32 %v333, 4294901760
        %430 = vmatpush1.xpose.msra.mxu0 %v429
        %431 = vmatprep.subr.mxu0 0.0
        %v432 = vand.u32 %v336, 4294901760
        %433 = vmatpush1.xpose.msra.mxu0 %v432
        %434 = vmatprep.subr.mxu0 0.0
        %v435 = vand.u32 %v339, 4294901760
        %436 = vmatpush1.xpose.msra.mxu0 %v435
        %437 = vmatprep.subr.mxu0 0.0
        %v438 = vand.u32 %v342, 4294901760
        %439 = vmatpush1.xpose.msra.mxu0 %v438
        %440 = vmatprep.subr.mxu0 0.0
        %v441 = vand.u32 %v345, 4294901760
        %442 = vmatpush1.xpose.msra.mxu0 %v441
        %443 = vmatprep.subr.mxu0 0.0
        %v444 = vand.u32 %v348, 4294901760
        %445 = vmatpush1.xpose.msra.mxu0 %v444
        %446 = vmatprep.subr.mxu0 0.0
        %v447 = vand.u32 %v351, 4294901760
        %448 = vmatpush1.xpose.msra.mxu0 %v447
        %449 = vmatprep.subr.mxu0 0.0
        %v450 = vand.u32 %v354, 4294901760
        %451 = vmatpush1.xpose.msra.mxu0 %v450
        %452 = vmatprep.subr.mxu0 0.0
        %v453 = vand.u32 %v357, 4294901760
        %454 = vmatpush1.xpose.msra.mxu0 %v453
        %455 = vmatprep.subr.mxu0 0.0
        %v456 = vand.u32 %v360, 4294901760
        %457 = vmatpush1.xpose.msra.mxu0 %v456
        %458 = vmatprep.subr.mxu0 0.0
        %v459 = vand.u32 %v363, 4294901760
        %460 = vmatpush1.xpose.msra.mxu0 %v459
        %461 = vmatprep.subr.mxu0 0.0
        %v462 = vand.u32 %v366, 4294901760
        %463 = vmatpush1.xpose.msra.mxu0 %v462
        %464 = vmatprep.subr.mxu0 0.0
        %v465 = vand.u32 %v369, 4294901760
        %466 = vmatpush1.xpose.msra.mxu0 %v465
        %467 = vmatprep.subr.mxu0 0.0
        %v468 = vand.u32 %v372, 4294901760
        %469 = vmatpush1.xpose.msra.mxu0 %v468
        %470 = vmatprep.subr.mxu0 0.0
        %v471 = vand.u32 %v375, 4294901760
        %472 = vmatpush1.xpose.msra.mxu0 %v471
        %473 = vmatprep.subr.mxu0 0.0
        %v474 = vand.u32 %v378, 4294901760
        %475 = vmatpush1.xpose.msra.mxu0 %v474
        %476 = vmatprep.subr.mxu0 0.0
        %v477 = vand.u32 %v381, 4294901760
        %478 = vmatpush1.xpose.msra.mxu0 %v477
        %479 = vmatprep.subr.mxu0 0.0
        %v480 = vand.u32 %v384, 4294901760
        %481 = vmatpush1.xpose.msra.mxu0 %v480
        %482 = vmatprep.subr.mxu0 0.0
        %v483 = vand.u32 %v387, 4294901760
        %484 = vmatpush1.xpose.msra.mxu0 %v483
        %485 = vmatprep.subr.mxu0 0.0
        %v486 = vand.u32 %v390, 4294901760
        %487 = vmatpush1.xpose.msra.mxu0 %v486
        %488 = vmatprep.subr.mxu0 0.0
        %v489 = vand.u32 %v393, 4294901760
        %490 = vmatpush1.xpose.msra.mxu0 %v489
        %491 = vmatprep.subr.mxu0 0.0
        %v492 = vand.u32 %v396, 4294901760
        %493 = vmatpush1.xpose.msra.mxu0 %v492
        %494 = vmatprep.subr.mxu0 0.0
        %v495 = vand.u32 %v399, 4294901760
        %496 = vmatpush1.xpose.msra.mxu0 %v495
        %497 = vmatprep.subr.mxu0 0.0
        %v498 = vand.u32 %v402, 4294901760
        %499 = vmatpush1.xpose.msra.mxu0 %v498
        %500 = vmatprep.mubr.f32.mxu0 0.0
        %v501 = vand.u32 %v306, 4294901760
        %v502 = vsub.f32 %v306, %v501
        %v503 = vand.u32 %v502, 4294901760
        %v504 = vsub.f32 %v502, %v503
        %v505 = vand.u32 %v504, 4294901760
        %506 = vmatmul.mubr.f32.gmra.mrb[0].mxu0 %v505
        %v507 = vpop.f32.mrb[0].mxu0
        %v508 = vadd.f32 %v302, %v507
        %v509 = vpop.f32.mrb[0].mxu0
        %v510 = vadd.f32 %v302, %v509
        %511 = vdwg.mxu0
        %512 = vmatprep.subr.mxu0 0.0
        %v513 = vand.u32 %v309, 4294901760
        %v514 = vsub.f32 %v309, %v513
        %v515 = vand.u32 %v514, 4294901760
        %v516 = vsub.f32 %v514, %v515
        %v517 = vand.u32 %v516, 4294901760
        %518 = vmatpush1.xpose.msra.mxu0 %v517
        %519 = vmatprep.subr.mxu0 0.0
        %v520 = vand.u32 %v312, 4294901760
        %v521 = vsub.f32 %v312, %v520
        %v522 = vand.u32 %v521, 4294901760
        %v523 = vsub.f32 %v521, %v522
        %v524 = vand.u32 %v523, 4294901760
        %525 = vmatpush1.xpose.msra.mxu0 %v524
        %526 = vmatprep.subr.mxu0 0.0
        %v527 = vand.u32 %v315, 4294901760
        %v528 = vsub.f32 %v315, %v527
        %v529 = vand.u32 %v528, 4294901760
        %v530 = vsub.f32 %v528, %v529
        %v531 = vand.u32 %v530, 4294901760
        %532 = vmatpush1.xpose.msra.mxu0 %v531
        %533 = vmatprep.subr.mxu0 0.0
        %v534 = vand.u32 %v318, 4294901760
        %v535 = vsub.f32 %v318, %v534
        %v536 = vand.u32 %v535, 4294901760
        %v537 = vsub.f32 %v535, %v536
        %v538 = vand.u32 %v537, 4294901760
        %539 = vmatpush1.xpose.msra.mxu0 %v538
        %540 = vmatprep.subr.mxu0 0.0
        %v541 = vand.u32 %v321, 4294901760
        %v542 = vsub.f32 %v321, %v541
        %v543 = vand.u32 %v542, 4294901760
        %v544 = vsub.f32 %v542, %v543
        %v545 = vand.u32 %v544, 4294901760
        %546 = vmatpush1.xpose.msra.mxu0 %v545
        %547 = vmatprep.subr.mxu0 0.0
        %v548 = vand.u32 %v324, 4294901760
        %v549 = vsub.f32 %v324, %v548
        %v550 = vand.u32 %v549, 4294901760
        %v551 = vsub.f32 %v549, %v550
        %v552 = vand.u32 %v551, 4294901760
        %553 = vmatpush1.xpose.msra.mxu0 %v552
        %554 = vmatprep.subr.mxu0 0.0
        %v555 = vand.u32 %v327, 4294901760
        %v556 = vsub.f32 %v327, %v555
        %v557 = vand.u32 %v556, 4294901760
        %v558 = vsub.f32 %v556, %v557
        %v559 = vand.u32 %v558, 4294901760
        %560 = vmatpush1.xpose.msra.mxu0 %v559
        %561 = vmatprep.subr.mxu0 0.0
        %v562 = vand.u32 %v330, 4294901760
        %v563 = vsub.f32 %v330, %v562
        %v564 = vand.u32 %v563, 4294901760
        %v565 = vsub.f32 %v563, %v564
        %v566 = vand.u32 %v565, 4294901760
        %567 = vmatpush1.xpose.msra.mxu0 %v566
        %568 = vmatprep.subr.mxu0 0.0
        %v569 = vand.u32 %v333, 4294901760
        %v570 = vsub.f32 %v333, %v569
        %v571 = vand.u32 %v570, 4294901760
        %v572 = vsub.f32 %v570, %v571
        %v573 = vand.u32 %v572, 4294901760
        %574 = vmatpush1.xpose.msra.mxu0 %v573
        %575 = vmatprep.subr.mxu0 0.0
        %v576 = vand.u32 %v336, 4294901760
        %v577 = vsub.f32 %v336, %v576
        %v578 = vand.u32 %v577, 4294901760
        %v579 = vsub.f32 %v577, %v578
        %v580 = vand.u32 %v579, 4294901760
        %581 = vmatpush1.xpose.msra.mxu0 %v580
        %582 = vmatprep.subr.mxu0 0.0
        %v583 = vand.u32 %v339, 4294901760
        %v584 = vsub.f32 %v339, %v583
        %v585 = vand.u32 %v584, 4294901760
        %v586 = vsub.f32 %v584, %v585
        %v587 = vand.u32 %v586, 4294901760
        %588 = vmatpush1.xpose.msra.mxu0 %v587
        %589 = vmatprep.subr.mxu0 0.0
        %v590 = vand.u32 %v342, 4294901760
        %v591 = vsub.f32 %v342, %v590
        %v592 = vand.u32 %v591, 4294901760
        %v593 = vsub.f32 %v591, %v592
        %v594 = vand.u32 %v593, 4294901760
        %595 = vmatpush1.xpose.msra.mxu0 %v594
        %596 = vmatprep.subr.mxu0 0.0
        %v597 = vand.u32 %v345, 4294901760
        %v598 = vsub.f32 %v345, %v597
        %v599 = vand.u32 %v598, 4294901760
        %v600 = vsub.f32 %v598, %v599
        %v601 = vand.u32 %v600, 4294901760
        %602 = vmatpush1.xpose.msra.mxu0 %v601
        %603 = vmatprep.subr.mxu0 0.0
        %v604 = vand.u32 %v348, 4294901760
        %v605 = vsub.f32 %v348, %v604
        %v606 = vand.u32 %v605, 4294901760
        %v607 = vsub.f32 %v605, %v606
        %v608 = vand.u32 %v607, 4294901760
        %609 = vmatpush1.xpose.msra.mxu0 %v608
        %610 = vmatprep.subr.mxu0 0.0
        %v611 = vand.u32 %v351, 4294901760
        %v612 = vsub.f32 %v351, %v611
        %v613 = vand.u32 %v612, 4294901760
        %v614 = vsub.f32 %v612, %v613
        %v615 = vand.u32 %v614, 4294901760
        %616 = vmatpush1.xpose.msra.mxu0 %v615
        %617 = vmatprep.subr.mxu0 0.0
        %v618 = vand.u32 %v354, 4294901760
        %v619 = vsub.f32 %v354, %v618
        %v620 = vand.u32 %v619, 4294901760
        %v621 = vsub.f32 %v619, %v620
        %v622 = vand.u32 %v621, 4294901760
        %623 = vmatpush1.xpose.msra.mxu0 %v622
        %624 = vmatprep.subr.mxu0 0.0
        %v625 = vand.u32 %v357, 4294901760
        %v626 = vsub.f32 %v357, %v625
        %v627 = vand.u32 %v626, 4294901760
        %v628 = vsub.f32 %v626, %v627
        %v629 = vand.u32 %v628, 4294901760
        %630 = vmatpush1.xpose.msra.mxu0 %v629
        %631 = vmatprep.subr.mxu0 0.0
        %v632 = vand.u32 %v360, 4294901760
        %v633 = vsub.f32 %v360, %v632
        %v634 = vand.u32 %v633, 4294901760
        %v635 = vsub.f32 %v633, %v634
        %v636 = vand.u32 %v635, 4294901760
        %637 = vmatpush1.xpose.msra.mxu0 %v636
        %638 = vmatprep.subr.mxu0 0.0
        %v639 = vand.u32 %v363, 4294901760
        %v640 = vsub.f32 %v363, %v639
        %v641 = vand.u32 %v640, 4294901760
        %v642 = vsub.f32 %v640, %v641
        %v643 = vand.u32 %v642, 4294901760
        %644 = vmatpush1.xpose.msra.mxu0 %v643
        %645 = vmatprep.subr.mxu0 0.0
        %v646 = vand.u32 %v366, 4294901760
        %v647 = vsub.f32 %v366, %v646
        %v648 = vand.u32 %v647, 4294901760
        %v649 = vsub.f32 %v647, %v648
        %v650 = vand.u32 %v649, 4294901760
        %651 = vmatpush1.xpose.msra.mxu0 %v650
        %652 = vmatprep.subr.mxu0 0.0
        %v653 = vand.u32 %v369, 4294901760
        %v654 = vsub.f32 %v369, %v653
        %v655 = vand.u32 %v654, 4294901760
        %v656 = vsub.f32 %v654, %v655
        %v657 = vand.u32 %v656, 4294901760
        %658 = vmatpush1.xpose.msra.mxu0 %v657
        %659 = vmatprep.subr.mxu0 0.0
        %v660 = vand.u32 %v372, 4294901760
        %v661 = vsub.f32 %v372, %v660
        %v662 = vand.u32 %v661, 4294901760
        %v663 = vsub.f32 %v661, %v662
        %v664 = vand.u32 %v663, 4294901760
        %665 = vmatpush1.xpose.msra.mxu0 %v664
        %666 = vmatprep.subr.mxu0 0.0
        %v667 = vand.u32 %v375, 4294901760
        %v668 = vsub.f32 %v375, %v667
        %v669 = vand.u32 %v668, 4294901760
        %v670 = vsub.f32 %v668, %v669
        %v671 = vand.u32 %v670, 4294901760
        %672 = vmatpush1.xpose.msra.mxu0 %v671
        %673 = vmatprep.subr.mxu0 0.0
        %v674 = vand.u32 %v378, 4294901760
        %v675 = vsub.f32 %v378, %v674
        %v676 = vand.u32 %v675, 4294901760
        %v677 = vsub.f32 %v675, %v676
        %v678 = vand.u32 %v677, 4294901760
        %679 = vmatpush1.xpose.msra.mxu0 %v678
        %680 = vmatprep.subr.mxu0 0.0
        %v681 = vand.u32 %v381, 4294901760
        %v682 = vsub.f32 %v381, %v681
        %v683 = vand.u32 %v682, 4294901760
        %v684 = vsub.f32 %v682, %v683
        %v685 = vand.u32 %v684, 4294901760
        %686 = vmatpush1.xpose.msra.mxu0 %v685
        %687 = vmatprep.subr.mxu0 0.0
        %v688 = vand.u32 %v384, 4294901760
        %v689 = vsub.f32 %v384, %v688
        %v690 = vand.u32 %v689, 4294901760
        %v691 = vsub.f32 %v689, %v690
        %v692 = vand.u32 %v691, 4294901760
        %693 = vmatpush1.xpose.msra.mxu0 %v692
        %694 = vmatprep.subr.mxu0 0.0
        %v695 = vand.u32 %v387, 4294901760
        %v696 = vsub.f32 %v387, %v695
        %v697 = vand.u32 %v696, 4294901760
        %v698 = vsub.f32 %v696, %v697
        %v699 = vand.u32 %v698, 4294901760
        %700 = vmatpush1.xpose.msra.mxu0 %v699
        %701 = vmatprep.subr.mxu0 0.0
        %v702 = vand.u32 %v390, 4294901760
        %v703 = vsub.f32 %v390, %v702
        %v704 = vand.u32 %v703, 4294901760
        %v705 = vsub.f32 %v703, %v704
        %v706 = vand.u32 %v705, 4294901760
        %707 = vmatpush1.xpose.msra.mxu0 %v706
        %708 = vmatprep.subr.mxu0 0.0
        %v709 = vand.u32 %v393, 4294901760
        %v710 = vsub.f32 %v393, %v709
        %v711 = vand.u32 %v710, 4294901760
        %v712 = vsub.f32 %v710, %v711
        %v713 = vand.u32 %v712, 4294901760
        %714 = vmatpush1.xpose.msra.mxu0 %v713
        %715 = vmatprep.subr.mxu0 0.0
        %v716 = vand.u32 %v396, 4294901760
        %v717 = vsub.f32 %v396, %v716
        %v718 = vand.u32 %v717, 4294901760
        %v719 = vsub.f32 %v717, %v718
        %v720 = vand.u32 %v719, 4294901760
        %721 = vmatpush1.xpose.msra.mxu0 %v720
        %722 = vmatprep.subr.mxu0 0.0
        %v723 = vand.u32 %v399, 4294901760
        %v724 = vsub.f32 %v399, %v723
        %v725 = vand.u32 %v724, 4294901760
        %v726 = vsub.f32 %v724, %v725
        %v727 = vand.u32 %v726, 4294901760
        %728 = vmatpush1.xpose.msra.mxu0 %v727
        %729 = vmatprep.subr.mxu0 0.0
        %v730 = vand.u32 %v402, 4294901760
        %v731 = vsub.f32 %v402, %v730
        %v732 = vand.u32 %v731, 4294901760
        %v733 = vsub.f32 %v731, %v732
        %v734 = vand.u32 %v733, 4294901760
        %735 = vmatpush1.xpose.msra.mxu0 %v734
        %736 = vmatprep.mubr.f32.mxu0 0.0
        %v737 = vand.u32 %v306, 4294901760
        %738 = vmatmul.mubr.f32.gmra.mrb[0].mxu0 %v737
        %v739 = vpop.f32.mrb[0].mxu0
        %v740 = vadd.f32 %v508, %v739
        %v741 = vpop.f32.mrb[0].mxu0
        %v742 = vadd.f32 %v510, %v741
        %743 = vdwg.mxu0
        %744 = vmatprep.subr.mxu0 0.0
        %v745 = vand.u32 %v309, 4294901760
        %v746 = vsub.f32 %v309, %v745
        %747 = vmatpush1.xpose.msra.mxu0 %v746
        %748 = vmatprep.subr.mxu0 0.0
        %v749 = vand.u32 %v312, 4294901760
        %v750 = vsub.f32 %v312, %v749
        %751 = vmatpush1.xpose.msra.mxu0 %v750
        %752 = vmatprep.subr.mxu0 0.0
        %v753 = vand.u32 %v315, 4294901760
        %v754 = vsub.f32 %v315, %v753
        %755 = vmatpush1.xpose.msra.mxu0 %v754
        %756 = vmatprep.subr.mxu0 0.0
        %v757 = vand.u32 %v318, 4294901760
        %v758 = vsub.f32 %v318, %v757
        %759 = vmatpush1.xpose.msra.mxu0 %v758
        %760 = vmatprep.subr.mxu0 0.0
        %v761 = vand.u32 %v321, 4294901760
        %v762 = vsub.f32 %v321, %v761
        %763 = vmatpush1.xpose.msra.mxu0 %v762
        %764 = vmatprep.subr.mxu0 0.0
        %v765 = vand.u32 %v324, 4294901760
        %v766 = vsub.f32 %v324, %v765
        %767 = vmatpush1.xpose.msra.mxu0 %v766
        %768 = vmatprep.subr.mxu0 0.0
        %v769 = vand.u32 %v327, 4294901760
        %v770 = vsub.f32 %v327, %v769
        %771 = vmatpush1.xpose.msra.mxu0 %v770
        %772 = vmatprep.subr.mxu0 0.0
        %v773 = vand.u32 %v330, 4294901760
        %v774 = vsub.f32 %v330, %v773
        %775 = vmatpush1.xpose.msra.mxu0 %v774
        %776 = vmatprep.subr.mxu0 0.0
        %v777 = vand.u32 %v333, 4294901760
        %v778 = vsub.f32 %v333, %v777
        %779 = vmatpush1.xpose.msra.mxu0 %v778
        %780 = vmatprep.subr.mxu0 0.0
        %v781 = vand.u32 %v336, 4294901760
        %v782 = vsub.f32 %v336, %v781
        %783 = vmatpush1.xpose.msra.mxu0 %v782
        %784 = vmatprep.subr.mxu0 0.0
        %v785 = vand.u32 %v339, 4294901760
        %v786 = vsub.f32 %v339, %v785
        %787 = vmatpush1.xpose.msra.mxu0 %v786
        %788 = vmatprep.subr.mxu0 0.0
        %v789 = vand.u32 %v342, 4294901760
        %v790 = vsub.f32 %v342, %v789
        %791 = vmatpush1.xpose.msra.mxu0 %v790
        %792 = vmatprep.subr.mxu0 0.0
        %v793 = vand.u32 %v345, 4294901760
        %v794 = vsub.f32 %v345, %v793
        %795 = vmatpush1.xpose.msra.mxu0 %v794
        %796 = vmatprep.subr.mxu0 0.0
        %v797 = vand.u32 %v348, 4294901760
        %v798 = vsub.f32 %v348, %v797
        %799 = vmatpush1.xpose.msra.mxu0 %v798
        %800 = vmatprep.subr.mxu0 0.0
        %v801 = vand.u32 %v351, 4294901760
        %v802 = vsub.f32 %v351, %v801
        %803 = vmatpush1.xpose.msra.mxu0 %v802
        %804 = vmatprep.subr.mxu0 0.0
        %v805 = vand.u32 %v354, 4294901760
        %v806 = vsub.f32 %v354, %v805
        %807 = vmatpush1.xpose.msra.mxu0 %v806
        %808 = vmatprep.subr.mxu0 0.0
        %v809 = vand.u32 %v357, 4294901760
        %v810 = vsub.f32 %v357, %v809
        %811 = vmatpush1.xpose.msra.mxu0 %v810
        %812 = vmatprep.subr.mxu0 0.0
        %v813 = vand.u32 %v360, 4294901760
        %v814 = vsub.f32 %v360, %v813
        %815 = vmatpush1.xpose.msra.mxu0 %v814
        %816 = vmatprep.subr.mxu0 0.0
        %v817 = vand.u32 %v363, 4294901760
        %v818 = vsub.f32 %v363, %v817
        %819 = vmatpush1.xpose.msra.mxu0 %v818
        %820 = vmatprep.subr.mxu0 0.0
        %v821 = vand.u32 %v366, 4294901760
        %v822 = vsub.f32 %v366, %v821
        %823 = vmatpush1.xpose.msra.mxu0 %v822
        %824 = vmatprep.subr.mxu0 0.0
        %v825 = vand.u32 %v369, 4294901760
        %v826 = vsub.f32 %v369, %v825
        %827 = vmatpush1.xpose.msra.mxu0 %v826
        %828 = vmatprep.subr.mxu0 0.0
        %v829 = vand.u32 %v372, 4294901760
        %v830 = vsub.f32 %v372, %v829
        %831 = vmatpush1.xpose.msra.mxu0 %v830
        %832 = vmatprep.subr.mxu0 0.0
        %v833 = vand.u32 %v375, 4294901760
        %v834 = vsub.f32 %v375, %v833
        %835 = vmatpush1.xpose.msra.mxu0 %v834
        %836 = vmatprep.subr.mxu0 0.0
        %v837 = vand.u32 %v378, 4294901760
        %v838 = vsub.f32 %v378, %v837
        %839 = vmatpush1.xpose.msra.mxu0 %v838
        %840 = vmatprep.subr.mxu0 0.0
        %v841 = vand.u32 %v381, 4294901760
        %v842 = vsub.f32 %v381, %v841
        %843 = vmatpush1.xpose.msra.mxu0 %v842
        %844 = vmatprep.subr.mxu0 0.0
        %v845 = vand.u32 %v384, 4294901760
        %v846 = vsub.f32 %v384, %v845
        %847 = vmatpush1.xpose.msra.mxu0 %v846
        %848 = vmatprep.subr.mxu0 0.0
        %v849 = vand.u32 %v387, 4294901760
        %v850 = vsub.f32 %v387, %v849
        %851 = vmatpush1.xpose.msra.mxu0 %v850
        %852 = vmatprep.subr.mxu0 0.0
        %v853 = vand.u32 %v390, 4294901760
        %v854 = vsub.f32 %v390, %v853
        %855 = vmatpush1.xpose.msra.mxu0 %v854
        %856 = vmatprep.subr.mxu0 0.0
        %v857 = vand.u32 %v393, 4294901760
        %v858 = vsub.f32 %v393, %v857
        %859 = vmatpush1.xpose.msra.mxu0 %v858
        %860 = vmatprep.subr.mxu0 0.0
        %v861 = vand.u32 %v396, 4294901760
        %v862 = vsub.f32 %v396, %v861
        %863 = vmatpush1.xpose.msra.mxu0 %v862
        %864 = vmatprep.subr.mxu0 0.0
        %v865 = vand.u32 %v399, 4294901760
        %v866 = vsub.f32 %v399, %v865
        %867 = vmatpush1.xpose.msra.mxu0 %v866
        %868 = vmatprep.subr.mxu0 0.0
        %v869 = vand.u32 %v402, 4294901760
        %v870 = vsub.f32 %v402, %v869
        %871 = vmatpush1.xpose.msra.mxu0 %v870
        %872 = vmatprep.mubr.f32.mxu0 0.0
        %v873 = vand.u32 %v306, 4294901760
        %v874 = vsub.f32 %v306, %v873
        %875 = vmatmul.mubr.f32.gmra.mrb[0].mxu0 %v874
        %v876 = vpop.f32.mrb[0].mxu0
        %v877 = vadd.f32 %v740, %v876
        %v878 = vpop.f32.mrb[0].mxu0
        %v879 = vadd.f32 %v742, %v878
        %880 = vdwg.mxu0
        %881 = vmatprep.subr.mxu0 0.0
        %v882 = vand.u32 %v309, 4294901760
        %883 = vmatpush1.xpose.msra.mxu0 %v882
        %884 = vmatprep.subr.mxu0 0.0
        %v885 = vand.u32 %v312, 4294901760
        %886 = vmatpush1.xpose.msra.mxu0 %v885
        %887 = vmatprep.subr.mxu0 0.0
        %v888 = vand.u32 %v315, 4294901760
        %889 = vmatpush1.xpose.msra.mxu0 %v888
        %890 = vmatprep.subr.mxu0 0.0
        %v891 = vand.u32 %v318, 4294901760
        %892 = vmatpush1.xpose.msra.mxu0 %v891
        %893 = vmatprep.subr.mxu0 0.0
        %v894 = vand.u32 %v321, 4294901760
        %895 = vmatpush1.xpose.msra.mxu0 %v894
        %896 = vmatprep.subr.mxu0 0.0
        %v897 = vand.u32 %v324, 4294901760
        %898 = vmatpush1.xpose.msra.mxu0 %v897
        %899 = vmatprep.subr.mxu0 0.0
        %v900 = vand.u32 %v327, 4294901760
        %901 = vmatpush1.xpose.msra.mxu0 %v900
        %902 = vmatprep.subr.mxu0 0.0
        %v903 = vand.u32 %v330, 4294901760
        %904 = vmatpush1.xpose.msra.mxu0 %v903
        %905 = vmatprep.subr.mxu0 0.0
        %v906 = vand.u32 %v333, 4294901760
        %907 = vmatpush1.xpose.msra.mxu0 %v906
        %908 = vmatprep.subr.mxu0 0.0
        %v909 = vand.u32 %v336, 4294901760
        %910 = vmatpush1.xpose.msra.mxu0 %v909
        %911 = vmatprep.subr.mxu0 0.0
        %v912 = vand.u32 %v339, 4294901760
        %913 = vmatpush1.xpose.msra.mxu0 %v912
        %914 = vmatprep.subr.mxu0 0.0
        %v915 = vand.u32 %v342, 4294901760
        %916 = vmatpush1.xpose.msra.mxu0 %v915
        %917 = vmatprep.subr.mxu0 0.0
        %v918 = vand.u32 %v345, 4294901760
        %919 = vmatpush1.xpose.msra.mxu0 %v918
        %920 = vmatprep.subr.mxu0 0.0
        %v921 = vand.u32 %v348, 4294901760
        %922 = vmatpush1.xpose.msra.mxu0 %v921
        %923 = vmatprep.subr.mxu0 0.0
        %v924 = vand.u32 %v351, 4294901760
        %925 = vmatpush1.xpose.msra.mxu0 %v924
        %926 = vmatprep.subr.mxu0 0.0
        %v927 = vand.u32 %v354, 4294901760
        %928 = vmatpush1.xpose.msra.mxu0 %v927
        %929 = vmatprep.subr.mxu0 0.0
        %v930 = vand.u32 %v357, 4294901760
        %931 = vmatpush1.xpose.msra.mxu0 %v930
        %932 = vmatprep.subr.mxu0 0.0
        %v933 = vand.u32 %v360, 4294901760
        %934 = vmatpush1.xpose.msra.mxu0 %v933
        %935 = vmatprep.subr.mxu0 0.0
        %v936 = vand.u32 %v363, 4294901760
        %937 = vmatpush1.xpose.msra.mxu0 %v936
        %938 = vmatprep.subr.mxu0 0.0
        %v939 = vand.u32 %v366, 4294901760
        %940 = vmatpush1.xpose.msra.mxu0 %v939
        %941 = vmatprep.subr.mxu0 0.0
        %v942 = vand.u32 %v369, 4294901760
        %943 = vmatpush1.xpose.msra.mxu0 %v942
        %944 = vmatprep.subr.mxu0 0.0
        %v945 = vand.u32 %v372, 4294901760
        %946 = vmatpush1.xpose.msra.mxu0 %v945
        %947 = vmatprep.subr.mxu0 0.0
        %v948 = vand.u32 %v375, 4294901760
        %949 = vmatpush1.xpose.msra.mxu0 %v948
        %950 = vmatprep.subr.mxu0 0.0
        %v951 = vand.u32 %v378, 4294901760
        %952 = vmatpush1.xpose.msra.mxu0 %v951
        %953 = vmatprep.subr.mxu0 0.0
        %v954 = vand.u32 %v381, 4294901760
        %955 = vmatpush1.xpose.msra.mxu0 %v954
        %956 = vmatprep.subr.mxu0 0.0
        %v957 = vand.u32 %v384, 4294901760
        %958 = vmatpush1.xpose.msra.mxu0 %v957
        %959 = vmatprep.subr.mxu0 0.0
        %v960 = vand.u32 %v387, 4294901760
        %961 = vmatpush1.xpose.msra.mxu0 %v960
        %962 = vmatprep.subr.mxu0 0.0
        %v963 = vand.u32 %v390, 4294901760
        %964 = vmatpush1.xpose.msra.mxu0 %v963
        %965 = vmatprep.subr.mxu0 0.0
        %v966 = vand.u32 %v393, 4294901760
        %967 = vmatpush1.xpose.msra.mxu0 %v966
        %968 = vmatprep.subr.mxu0 0.0
        %v969 = vand.u32 %v396, 4294901760
        %970 = vmatpush1.xpose.msra.mxu0 %v969
        %971 = vmatprep.subr.mxu0 0.0
        %v972 = vand.u32 %v399, 4294901760
        %973 = vmatpush1.xpose.msra.mxu0 %v972
        %974 = vmatprep.subr.mxu0 0.0
        %v975 = vand.u32 %v402, 4294901760
        %976 = vmatpush1.xpose.msra.mxu0 %v975
        %977 = vmatprep.mubr.f32.mxu0 0.0
        %v978 = vand.u32 %v306, 4294901760
        %v979 = vsub.f32 %v306, %v978
        %v980 = vand.u32 %v979, 4294901760
        %981 = vmatmul.mubr.f32.gmra.mrb[0].mxu0 %v980
        %v982 = vpop.f32.mrb[0].mxu0
        %v983 = vadd.f32 %v877, %v982
        %v984 = vpop.f32.mrb[0].mxu0
        %v985 = vadd.f32 %v879, %v984
        %986 = vdwg.mxu0
        %987 = vmatprep.subr.mxu0 0.0
        %v988 = vand.u32 %v309, 4294901760
        %v989 = vsub.f32 %v309, %v988
        %v990 = vand.u32 %v989, 4294901760
        %991 = vmatpush1.xpose.msra.mxu0 %v990
        %992 = vmatprep.subr.mxu0 0.0
        %v993 = vand.u32 %v312, 4294901760
        %v994 = vsub.f32 %v312, %v993
        %v995 = vand.u32 %v994, 4294901760
        %996 = vmatpush1.xpose.msra.mxu0 %v995
        %997 = vmatprep.subr.mxu0 0.0
        %v998 = vand.u32 %v315, 4294901760
        %v999 = vsub.f32 %v315, %v998
        %v1000 = vand.u32 %v999, 4294901760
        %1001 = vmatpush1.xpose.msra.mxu0 %v1000
        %1002 = vmatprep.subr.mxu0 0.0
        %v1003 = vand.u32 %v318, 4294901760
        %v1004 = vsub.f32 %v318, %v1003
        %v1005 = vand.u32 %v1004, 4294901760
        %1006 = vmatpush1.xpose.msra.mxu0 %v1005
        %1007 = vmatprep.subr.mxu0 0.0
        %v1008 = vand.u32 %v321, 4294901760
        %v1009 = vsub.f32 %v321, %v1008
        %v1010 = vand.u32 %v1009, 4294901760
        %1011 = vmatpush1.xpose.msra.mxu0 %v1010
        %1012 = vmatprep.subr.mxu0 0.0
        %v1013 = vand.u32 %v324, 4294901760
        %v1014 = vsub.f32 %v324, %v1013
        %v1015 = vand.u32 %v1014, 4294901760
        %1016 = vmatpush1.xpose.msra.mxu0 %v1015
        %1017 = vmatprep.subr.mxu0 0.0
        %v1018 = vand.u32 %v327, 4294901760
        %v1019 = vsub.f32 %v327, %v1018
        %v1020 = vand.u32 %v1019, 4294901760
        %1021 = vmatpush1.xpose.msra.mxu0 %v1020
        %1022 = vmatprep.subr.mxu0 0.0
        %v1023 = vand.u32 %v330, 4294901760
        %v1024 = vsub.f32 %v330, %v1023
        %v1025 = vand.u32 %v1024, 4294901760
        %1026 = vmatpush1.xpose.msra.mxu0 %v1025
        %1027 = vmatprep.subr.mxu0 0.0
        %v1028 = vand.u32 %v333, 4294901760
        %v1029 = vsub.f32 %v333, %v1028
        %v1030 = vand.u32 %v1029, 4294901760
        %1031 = vmatpush1.xpose.msra.mxu0 %v1030
        %1032 = vmatprep.subr.mxu0 0.0
        %v1033 = vand.u32 %v336, 4294901760
        %v1034 = vsub.f32 %v336, %v1033
        %v1035 = vand.u32 %v1034, 4294901760
        %1036 = vmatpush1.xpose.msra.mxu0 %v1035
        %1037 = vmatprep.subr.mxu0 0.0
        %v1038 = vand.u32 %v339, 4294901760
        %v1039 = vsub.f32 %v339, %v1038
        %v1040 = vand.u32 %v1039, 4294901760
        %1041 = vmatpush1.xpose.msra.mxu0 %v1040
        %1042 = vmatprep.subr.mxu0 0.0
        %v1043 = vand.u32 %v342, 4294901760
        %v1044 = vsub.f32 %v342, %v1043
        %v1045 = vand.u32 %v1044, 4294901760
        %1046 = vmatpush1.xpose.msra.mxu0 %v1045
        %1047 = vmatprep.subr.mxu0 0.0
        %v1048 = vand.u32 %v345, 4294901760
        %v1049 = vsub.f32 %v345, %v1048
        %v1050 = vand.u32 %v1049, 4294901760
        %1051 = vmatpush1.xpose.msra.mxu0 %v1050
        %1052 = vmatprep.subr.mxu0 0.0
        %v1053 = vand.u32 %v348, 4294901760
        %v1054 = vsub.f32 %v348, %v1053
        %v1055 = vand.u32 %v1054, 4294901760
        %1056 = vmatpush1.xpose.msra.mxu0 %v1055
        %1057 = vmatprep.subr.mxu0 0.0
        %v1058 = vand.u32 %v351, 4294901760
        %v1059 = vsub.f32 %v351, %v1058
        %v1060 = vand.u32 %v1059, 4294901760
        %1061 = vmatpush1.xpose.msra.mxu0 %v1060
        %1062 = vmatprep.subr.mxu0 0.0
        %v1063 = vand.u32 %v354, 4294901760
        %v1064 = vsub.f32 %v354, %v1063
        %v1065 = vand.u32 %v1064, 4294901760
        %1066 = vmatpush1.xpose.msra.mxu0 %v1065
        %1067 = vmatprep.subr.mxu0 0.0
        %v1068 = vand.u32 %v357, 4294901760
        %v1069 = vsub.f32 %v357, %v1068
        %v1070 = vand.u32 %v1069, 4294901760
        %1071 = vmatpush1.xpose.msra.mxu0 %v1070
        %1072 = vmatprep.subr.mxu0 0.0
        %v1073 = vand.u32 %v360, 4294901760
        %v1074 = vsub.f32 %v360, %v1073
        %v1075 = vand.u32 %v1074, 4294901760
        %1076 = vmatpush1.xpose.msra.mxu0 %v1075
        %1077 = vmatprep.subr.mxu0 0.0
        %v1078 = vand.u32 %v363, 4294901760
        %v1079 = vsub.f32 %v363, %v1078
        %v1080 = vand.u32 %v1079, 4294901760
        %1081 = vmatpush1.xpose.msra.mxu0 %v1080
        %1082 = vmatprep.subr.mxu0 0.0
        %v1083 = vand.u32 %v366, 4294901760
        %v1084 = vsub.f32 %v366, %v1083
        %v1085 = vand.u32 %v1084, 4294901760
        %1086 = vmatpush1.xpose.msra.mxu0 %v1085
        %1087 = vmatprep.subr.mxu0 0.0
        %v1088 = vand.u32 %v369, 4294901760
        %v1089 = vsub.f32 %v369, %v1088
        %v1090 = vand.u32 %v1089, 4294901760
        %1091 = vmatpush1.xpose.msra.mxu0 %v1090
        %1092 = vmatprep.subr.mxu0 0.0
        %v1093 = vand.u32 %v372, 4294901760
        %v1094 = vsub.f32 %v372, %v1093
        %v1095 = vand.u32 %v1094, 4294901760
        %1096 = vmatpush1.xpose.msra.mxu0 %v1095
        %1097 = vmatprep.subr.mxu0 0.0
        %v1098 = vand.u32 %v375, 4294901760
        %v1099 = vsub.f32 %v375, %v1098
        %v1100 = vand.u32 %v1099, 4294901760
        %1101 = vmatpush1.xpose.msra.mxu0 %v1100
        %1102 = vmatprep.subr.mxu0 0.0
        %v1103 = vand.u32 %v378, 4294901760
        %v1104 = vsub.f32 %v378, %v1103
        %v1105 = vand.u32 %v1104, 4294901760
        %1106 = vmatpush1.xpose.msra.mxu0 %v1105
        %1107 = vmatprep.subr.mxu0 0.0
        %v1108 = vand.u32 %v381, 4294901760
        %v1109 = vsub.f32 %v381, %v1108
        %v1110 = vand.u32 %v1109, 4294901760
        %1111 = vmatpush1.xpose.msra.mxu0 %v1110
        %1112 = vmatprep.subr.mxu0 0.0
        %v1113 = vand.u32 %v384, 4294901760
        %v1114 = vsub.f32 %v384, %v1113
        %v1115 = vand.u32 %v1114, 4294901760
        %1116 = vmatpush1.xpose.msra.mxu0 %v1115
        %1117 = vmatprep.subr.mxu0 0.0
        %v1118 = vand.u32 %v387, 4294901760
        %v1119 = vsub.f32 %v387, %v1118
        %v1120 = vand.u32 %v1119, 4294901760
        %1121 = vmatpush1.xpose.msra.mxu0 %v1120
        %1122 = vmatprep.subr.mxu0 0.0
        %v1123 = vand.u32 %v390, 4294901760
        %v1124 = vsub.f32 %v390, %v1123
        %v1125 = vand.u32 %v1124, 4294901760
        %1126 = vmatpush1.xpose.msra.mxu0 %v1125
        %1127 = vmatprep.subr.mxu0 0.0
        %v1128 = vand.u32 %v393, 4294901760
        %v1129 = vsub.f32 %v393, %v1128
        %v1130 = vand.u32 %v1129, 4294901760
        %1131 = vmatpush1.xpose.msra.mxu0 %v1130
        %1132 = vmatprep.subr.mxu0 0.0
        %v1133 = vand.u32 %v396, 4294901760
        %v1134 = vsub.f32 %v396, %v1133
        %v1135 = vand.u32 %v1134, 4294901760
        %1136 = vmatpush1.xpose.msra.mxu0 %v1135
        %1137 = vmatprep.subr.mxu0 0.0
        %v1138 = vand.u32 %v399, 4294901760
        %v1139 = vsub.f32 %v399, %v1138
        %v1140 = vand.u32 %v1139, 4294901760
        %1141 = vmatpush1.xpose.msra.mxu0 %v1140
        %1142 = vmatprep.subr.mxu0 0.0
        %v1143 = vand.u32 %v402, 4294901760
        %v1144 = vsub.f32 %v402, %v1143
        %v1145 = vand.u32 %v1144, 4294901760
        %1146 = vmatpush1.xpose.msra.mxu0 %v1145
        %1147 = vmatprep.mubr.f32.mxu0 0.0
        %v1148 = vand.u32 %v306, 4294901760
        %1149 = vmatmul.mubr.f32.gmra.mrb[0].mxu0 %v1148
        %v1150 = vpop.f32.mrb[0].mxu0
        %v1151 = vadd.f32 %v983, %v1150
        %v1152 = vpop.f32.mrb[0].mxu0
        %v1153 = vadd.f32 %v985, %v1152
        %1154 = vdwg.mxu0
        %1155 = vmatprep.subr.mxu0 0.0
        %v1156 = vand.u32 %v309, 4294901760
        %1157 = vmatpush1.xpose.msra.mxu0 %v1156
        %1158 = vmatprep.subr.mxu0 0.0
        %v1159 = vand.u32 %v312, 4294901760
        %1160 = vmatpush1.xpose.msra.mxu0 %v1159
        %1161 = vmatprep.subr.mxu0 0.0
        %v1162 = vand.u32 %v315, 4294901760
        %1163 = vmatpush1.xpose.msra.mxu0 %v1162
        %1164 = vmatprep.subr.mxu0 0.0
        %v1165 = vand.u32 %v318, 4294901760
        %1166 = vmatpush1.xpose.msra.mxu0 %v1165
        %1167 = vmatprep.subr.mxu0 0.0
        %v1168 = vand.u32 %v321, 4294901760
        %1169 = vmatpush1.xpose.msra.mxu0 %v1168
        %1170 = vmatprep.subr.mxu0 0.0
        %v1171 = vand.u32 %v324, 4294901760
        %1172 = vmatpush1.xpose.msra.mxu0 %v1171
        %1173 = vmatprep.subr.mxu0 0.0
        %v1174 = vand.u32 %v327, 4294901760
        %1175 = vmatpush1.xpose.msra.mxu0 %v1174
        %1176 = vmatprep.subr.mxu0 0.0
        %v1177 = vand.u32 %v330, 4294901760
        %1178 = vmatpush1.xpose.msra.mxu0 %v1177
        %1179 = vmatprep.subr.mxu0 0.0
        %v1180 = vand.u32 %v333, 4294901760
        %1181 = vmatpush1.xpose.msra.mxu0 %v1180
        %1182 = vmatprep.subr.mxu0 0.0
        %v1183 = vand.u32 %v336, 4294901760
        %1184 = vmatpush1.xpose.msra.mxu0 %v1183
        %1185 = vmatprep.subr.mxu0 0.0
        %v1186 = vand.u32 %v339, 4294901760
        %1187 = vmatpush1.xpose.msra.mxu0 %v1186
        %1188 = vmatprep.subr.mxu0 0.0
        %v1189 = vand.u32 %v342, 4294901760
        %1190 = vmatpush1.xpose.msra.mxu0 %v1189
        %1191 = vmatprep.subr.mxu0 0.0
        %v1192 = vand.u32 %v345, 4294901760
        %1193 = vmatpush1.xpose.msra.mxu0 %v1192
        %1194 = vmatprep.subr.mxu0 0.0
        %v1195 = vand.u32 %v348, 4294901760
        %1196 = vmatpush1.xpose.msra.mxu0 %v1195
        %1197 = vmatprep.subr.mxu0 0.0
        %v1198 = vand.u32 %v351, 4294901760
        %1199 = vmatpush1.xpose.msra.mxu0 %v1198
        %1200 = vmatprep.subr.mxu0 0.0
        %v1201 = vand.u32 %v354, 4294901760
        %1202 = vmatpush1.xpose.msra.mxu0 %v1201
        %1203 = vmatprep.subr.mxu0 0.0
        %v1204 = vand.u32 %v357, 4294901760
        %1205 = vmatpush1.xpose.msra.mxu0 %v1204
        %1206 = vmatprep.subr.mxu0 0.0
        %v1207 = vand.u32 %v360, 4294901760
        %1208 = vmatpush1.xpose.msra.mxu0 %v1207
        %1209 = vmatprep.subr.mxu0 0.0
        %v1210 = vand.u32 %v363, 4294901760
        %1211 = vmatpush1.xpose.msra.mxu0 %v1210
        %1212 = vmatprep.subr.mxu0 0.0
        %v1213 = vand.u32 %v366, 4294901760
        %1214 = vmatpush1.xpose.msra.mxu0 %v1213
        %1215 = vmatprep.subr.mxu0 0.0
        %v1216 = vand.u32 %v369, 4294901760
        %1217 = vmatpush1.xpose.msra.mxu0 %v1216
        %1218 = vmatprep.subr.mxu0 0.0
        %v1219 = vand.u32 %v372, 4294901760
        %1220 = vmatpush1.xpose.msra.mxu0 %v1219
        %1221 = vmatprep.subr.mxu0 0.0
        %v1222 = vand.u32 %v375, 4294901760
        %1223 = vmatpush1.xpose.msra.mxu0 %v1222
        %1224 = vmatprep.subr.mxu0 0.0
        %v1225 = vand.u32 %v378, 4294901760
        %1226 = vmatpush1.xpose.msra.mxu0 %v1225
        %1227 = vmatprep.subr.mxu0 0.0
        %v1228 = vand.u32 %v381, 4294901760
        %1229 = vmatpush1.xpose.msra.mxu0 %v1228
        %1230 = vmatprep.subr.mxu0 0.0
        %v1231 = vand.u32 %v384, 4294901760
        %1232 = vmatpush1.xpose.msra.mxu0 %v1231
        %1233 = vmatprep.subr.mxu0 0.0
        %v1234 = vand.u32 %v387, 4294901760
        %1235 = vmatpush1.xpose.msra.mxu0 %v1234
        %1236 = vmatprep.subr.mxu0 0.0
        %v1237 = vand.u32 %v390, 4294901760
        %1238 = vmatpush1.xpose.msra.mxu0 %v1237
        %1239 = vmatprep.subr.mxu0 0.0
        %v1240 = vand.u32 %v393, 4294901760
        %1241 = vmatpush1.xpose.msra.mxu0 %v1240
        %1242 = vmatprep.subr.mxu0 0.0
        %v1243 = vand.u32 %v396, 4294901760
        %1244 = vmatpush1.xpose.msra.mxu0 %v1243
        %1245 = vmatprep.subr.mxu0 0.0
        %v1246 = vand.u32 %v399, 4294901760
        %1247 = vmatpush1.xpose.msra.mxu0 %v1246
        %1248 = vmatprep.subr.mxu0 0.0
        %v1249 = vand.u32 %v402, 4294901760
        %1250 = vmatpush1.xpose.msra.mxu0 %v1249
        %1251 = vmatprep.mubr.f32.mxu0 0.0
        %v1252 = vand.u32 %v306, 4294901760
        %1253 = vmatmul.mubr.f32.gmra.mrb[0].mxu0 %v1252
        %v1254 = vpop.f32.mrb[0].mxu0
        %v1255 = vadd.f32 %v1151, %v1254
        %v1256 = vpop.f32.mrb[0].mxu0
        %v1257 = vadd.f32 %v1153, %v1256
        %1258 = vdwg.mxu0
        %v1259 = vmax.f32 %v1255, 0.0
        %v1260 = vmax.f32 %v1257, 0.0
        %s1261 = sld [smem:[#allocation3]]
        %v1262 = vstv %s1261
        %v1263 = vmul.f32 %v1259, %v1262
        %v1264 = vmul.f32 %v1260, %v1262
        %s1265 = sld [smem:[#allocation3 + $0x1]]
        %v1266 = vstv %s1265
        %v1267 = vmul.f32 %v1259, %v1266
        %v1268 = vmul.f32 %v1260, %v1266
        %v1271 = vrot.slane %v1267, 1
        %v1272 = vrot.slane %v1268, 1
        %v1275 = vadd.f32 %v1263, %v1271
        %v1276 = vadd.f32 %v1264, %v1272
        %s1277 = sld [smem:[#allocation3 + $0x2]]
        %v1278 = vstv %s1277
        %v1279 = vmul.f32 %v1259, %v1278
        %v1280 = vmul.f32 %v1260, %v1278
        %v1283 = vrot.slane %v1279, 2
        %v1284 = vrot.slane %v1280, 2
        %v1287 = vadd.f32 %v1275, %v1283
        %v1288 = vadd.f32 %v1276, %v1284
        %s1289 = sld [smem:[#allocation2]]
        %v1290 = vstv %s1289
        %v1291 = vadd.f32 %v1287, %v1290
        %v1292 = vadd.f32 %v1288, %v1290
        %v1293 = vxor.u32 %v1291, 2147483648
        %v1294 = vxor.u32 %v1292, 2147483648
        %v1295 = vmul.f32 %v1293, 1.442695
        %v1296 = vpow.pop %v1295
        %v1297 = vmul.f32 %v1294, 1.442695
        %v1298 = vpow.pop %v1297
        %v1299 = vadd.f32 %v1296, 1.0
        %v1300 = vadd.f32 %v1298, 1.0
        %v1301 = vrcp.pop %v1299
        %v1302 = vmul.f32 1.0, %v1301
        %v1303 = vrcp.pop %v1300
        %v1304 = vmul.f32 1.0, %v1303
        %v1307 = vcombine.low %v1302, %v1304
        %v1309 = vunpack.c.l.s4 1966171168
        %v1310 = vunpack.c.0.s8 %v1309
        %v1311 = vlaneseq
        %v1312 = vshrl.u32 %v1311, 7
        %v1313 = vsub.s32 %v1310, %v1312
        %v1314 = vrot.slane %v1307, %v1313
        %v1316 = vunpack.c.l.s4 1966171168
        %v1317 = vunpack.c.0.s8 %v1316
        %v1318 = vlaneseq
        %v1319 = vshrl.u32 %v1318, 7
        %v1320 = vsub.s32 %v1317, %v1319
        %v1321 = vrot.slane %v1314, %v1320
        %v1323 = vlaneseq
        %vm1324 = vcmp.ge.s32.totalorder %v1323, 0
        %vm1325 = vcmp.lt.s32.totalorder %v1323, 256
        %vm1326 = vmand %vm1324, %vm1325
        %1327 = vst.msk [vmem:[%s245] sm:$0x3] %vm1326, %v1321
        %s1328 = sand.u32 %s139, 1
        %s1329 = scalar_lea.sflag [#allocation4], %s1328
        %s1330 = sand.u32 %s139, 1
        %s1331 = smul.addr %s1330, 2
        %s1332 = scalar_lea.vmem [#allocation6], %s1331
        // Predicated region
        $region45: #{tpu_custom_call.1} parent=39 // pred_check
          %p1333 = pneg %p149
        $region46: #{tpu_custom_call.1} parent=39 // pred_check_branch
          %1335 = sbr.rel (%p1333) target = $region48
        $region47: #{tpu_custom_call.1} parent=39 // pred_region
          %s1336 = smul.u32 2, %s21
          %s1337 = ssub.s32 3, %s1336
          %p1338 = scmp.lt.s32.totalorder %s1337, 2
          %s1339 = scalar_select %p1338, %s1337, 2
          %s1340 = smul.u32 16, %s1339
          %s1342 = ssub.s32 32, %s1340
          %1343 = vsyncadd %s1329, %s1342
          %p1344 = scmp.ne.s32.totalorder 0, %s1340
          %s1345 = smul.addr %s1336, 16
          %s1346 = scalar_lea.hbm %s5, %s1345
          %s1347 = sshll.u32 %s1339, 4
          %s1348 = sshll.u32 %s1332, 4
          %s1349 = int_to_ptr.vmem [resolvable:$true] %s1348
          %1351 = dma.vmem_to_hbm [thread:$0]  (%p1344), %s1349, %s1347, %s1346, %s1329
        $region48: #{tpu_custom_call.1} parent=39 // pred_fallthru
          _
      $region40: #{tpu_custom_call.1} parent=5 // pred_fallthru
        _
      %p1352 = scmp.le.s32.totalorder 2, %s16
      // Predicated region
      $region49: #{tpu_custom_call.1} parent=5 // pred_check
        %p1353 = pneg %p1352
      $region50: #{tpu_custom_call.1} parent=5 // pred_check_branch
        %1355 = sbr.rel (%p1353) target = $region52
      $region51: #{tpu_custom_call.1} parent=5 // pred_region
        %s1356 = ssub.s32 %s16, 2
        // Predicated region
        $region53: #{tpu_custom_call.1} parent=51 // pred_check
          %p1357 = pneg %p155
        $region54: #{tpu_custom_call.1} parent=51 // pred_check_branch
          %1359 = sbr.rel (%p1357) target = $region56
        $region55: #{tpu_custom_call.1} parent=51 // pred_region
          %s1360 = sand.u32 %s140, 1
          %s1361 = scalar_lea.sflag [#allocation4], %s1360
          %s1362 = sand.u32 %s140, 1
          %s1363 = smul.addr %s1362, 2
          %s1364 = scalar_lea.vmem [#allocation6], %s1363
          %1365 = dma.done %s1361, 32
        $region56: #{tpu_custom_call.1} parent=51 // pred_fallthru
          _
      $region52: #{tpu_custom_call.1} parent=5 // pred_fallthru
        _
    $region6: #{tpu_custom_call.1} parent=1 // loop_footer
      %s20 = sadd.s32 1, %s16
    $region7: #{tpu_custom_call.1} parent=1 // loop_footer_branch
      %15 = sbr.rel target = $region3
    $region8: #{tpu_custom_call.1} parent=1 // loop_exit
      _
    %1366 = vsyncpa [#allocation4], 1
    %s1367 = scalar_lea.sflag [#allocation4], 1
    %1368 = vsyncpa %s1367, 1
    %1369 = vsyncpa [#allocation5], 1
    %s1370 = scalar_lea.sflag [#allocation5], 1
    %1371 = vsyncpa %s1370, 1

</llo_original>
